<compile_context>
chip_gen: v7x
topology: tpu7x:2x2x1
jax: 0.10.0
libtpu: 0.0.40
codegen_flags: <defaults>
</compile_context>

<pallas_src>
import math

import jax
import jax.numpy as jnp
from jax.experimental import pallas as pl
from jax.experimental.pallas import tpu as pltpu


def _round_up(x, m):
    return ((x + m - 1) // m) * m


def mlp_kernel(x_ref,
               w1_ref, b1_ref,
               w2_ref, b2_ref,
               w3_ref, b3_ref,
               w4_ref, b4_ref,
               o_ref):
    """One batch tile through the full MLP (bf16 MXU operands, f32 accumulation)."""
    # In-kernel cast of x to bf16 (hidden under MXU work; no wrapper HBM pass).
    x = x_ref[...].astype(jnp.bfloat16)

    # fc_in: (TB,18) @ (18,256) + (1,256) -> ReLU -> bf16 (fused epilogue cast)
    h = jnp.dot(x, w1_ref[...], preferred_element_type=jnp.float32)
    h = jnp.maximum(h + b1_ref[...], 0.0).astype(jnp.bfloat16)

    # fc_list[0]: (TB,256) @ (256,32) + (1,32) -> dropout(identity, eval) -> ReLU
    # TODO(synk): training-mode dropout (p=0.2) would use pltpu.prng_random_bits; eval mode = identity.
    h = jnp.dot(h, w2_ref[...], preferred_element_type=jnp.float32)
    h = jnp.maximum(h + b2_ref[...], 0.0).astype(jnp.bfloat16)

    # fc_list[1]: (TB,32) @ (32,8) + (1,8) -> dropout(identity, eval) -> ReLU
    h = jnp.dot(h, w3_ref[...], preferred_element_type=jnp.float32)
    h = jnp.maximum(h + b3_ref[...], 0.0).astype(jnp.bfloat16)

    # fc_out: (TB,8) @ (8,2) + (1,2)
    out = jnp.dot(h, w4_ref[...], preferred_element_type=jnp.float32) + b4_ref[...]
    o_ref[...] = out.astype(o_ref.dtype)


def mlp_forward(x, params, *, tile_batch=4096):
    """x: (B, n_input) float32. params: [(W_bf16, b_f32)] * 4. Returns (B, n_output) float32.

    tile_batch: batch rows per grid step. Default 4096 (~12 MiB VMEM incl. the
    lane-padded x/out blocks and double-buffering) fits every generation,
    including v7x's 64 MiB VMEM; on v6e/v5e (128 MiB) it can be pushed to
    8192-16384 with a higher vmem_limit_bytes if desired.
    """
    (w1, b1), (w2, b2), (w3, b3), (w4, b4) = params
    B, n_input = x.shape
    n_output = w4.shape[1]

    # Batch tile: multiple of 16 (bf16 sublane packing), capped near the batch size.
    tb = min(_round_up(tile_batch, 16), _round_up(B, 16))
    # Ensure >=2 grid steps when possible so ("parallel",) feeds both v7x TensorCores.
    if B > 16 and pl.cdiv(B, tb) < 2:
        tb = _round_up(pl.cdiv(B, 2), 16)

    grid = (pl.cdiv(B, tb),)   # tail block handled by Pallas masking; no jnp.pad copy

    def resident(arr):
        # Full-block, constant index map -> stays in VMEM across all grid steps.
        return pl.BlockSpec(arr.shape, lambda i: (0, 0))

    # Advisory cost estimate so XLA schedules neighbors sensibly.
    mac = n_input * 256 + 256 * 32 + 32 * 8 + 8 * n_output
    weight_bytes = 2 * mac + 4 * (256 + 32 + 8 + n_output)
    cost = pl.CostEstimate(
        flops=2 * B * mac,
        transcendentals=0,
        bytes_accessed=B * n_input * 4 + B * n_output * 4 + weight_bytes,
    )

    out = pl.pallas_call(
        mlp_kernel,
        out_shape=jax.ShapeDtypeStruct((B, n_output), jnp.float32),
        grid=grid,
        in_specs=[
            pl.BlockSpec((tb, n_input), lambda i: (i, 0)),   # x: batch-tiled (f32)
            resident(w1), resident(b1),
            resident(w2), resident(b2),
            resident(w3), resident(b3),
            resident(w4), resident(b4),
        ],
        out_specs=pl.BlockSpec((tb, n_output), lambda i: (i, 0)),
        compiler_params=pltpu.CompilerParams(
            dimension_semantics=("parallel",),   # megacore batch split on v7x
            vmem_limit_bytes=48 << 20,           # safe on v7x's 64 MiB VMEM
        ),
        cost_estimate=cost,
    )(x, w1, b1, w2, b2, w3, b3, w4, b4)

    return out


def init_params(key, n_input=18, n_output=2):
    """Deterministic init mirroring the PyTorch module's shapes.

    Weights ~ U(-0.1, 0.1) (module init); biases ~ U(-1/sqrt(fan_in), 1/sqrt(fan_in))
    (PyTorch nn.Linear default). Stored transposed: (in_features, out_features).
    Weights are cast to bf16 HERE (once) so mlp_forward does no per-call casts;
    biases stay f32 for the f32 bias-add/ReLU epilogue.
    """
    dims = [(n_input, 256), (256, 32), (32, 8), (8, n_output)]
    params = []
    for fan_in, fan_out in dims:
        key, kw, kb = jax.random.split(key, 3)
        w = jax.random.uniform(kw, (fan_in, fan_out), jnp.float32, -0.1, 0.1)
        bound = 1.0 / math.sqrt(fan_in)
        b = jax.random.uniform(kb, (1, fan_out), jnp.float32, -bound, bound)
        params.append((w.astype(jnp.bfloat16), b))
    return params


def reference_forward(x, params):
    """Pure-JAX reference with the same bf16-operand / f32-accumulate recipe."""
    (w1, b1), (w2, b2), (w3, b3), (w4, b4) = params
    h = jnp.dot(x.astype(jnp.bfloat16), w1, preferred_element_type=jnp.float32)
    h = jnp.maximum(h + b1, 0.0)
    h = jnp.dot(h.astype(jnp.bfloat16), w2, preferred_element_type=jnp.float32)
    h = jnp.maximum(h + b2, 0.0)          # dropout = identity (eval)
    h = jnp.dot(h.astype(jnp.bfloat16), w3, preferred_element_type=jnp.float32)
    h = jnp.maximum(h + b3, 0.0)
    return jnp.dot(h.astype(jnp.bfloat16), w4, preferred_element_type=jnp.float32) + b4


if __name__ == "__main__":
    key = jax.random.PRNGKey(0)
    key, kx = jax.random.split(key)

    B, n_input, n_output = 10, 18, 2
    x = jax.random.normal(kx, (B, n_input), jnp.float32)
    params = init_params(key, n_input=n_input, n_output=n_output)

    # Single-tile path (B=10, tb=16, grid=(1,), masked tail block).
    out = jax.block_until_ready(mlp_forward(x, params))
    ref = reference_forward(x, params)
    assert out.shape == (B, n_output)
    assert jnp.allclose(out, ref, atol=1e-3, rtol=1e-3), "mismatch vs reference"

    # Multi-step grid path with a batch tail (300 rows, tb=128 -> grid=(3,), last block partial).
    key, kx2 = jax.random.split(key)
    B2 = 300
    x2 = jax.random.normal(kx2, (B2, n_input), jnp.float32)
    out2 = jax.block_until_ready(mlp_forward(x2, params, tile_batch=128))
    ref2 = reference_forward(x2, params)
    assert out2.shape == (B2, n_output)
    assert jnp.allclose(out2, ref2, atol=1e-3, rtol=1e-3), "mismatch vs reference (tiled)"

    # Default-tile path on a medium batch: tb auto-shrinks so the grid has >=2 steps (megacore).
    key, kx3 = jax.random.split(key)
    B3 = 2048
    x3 = jax.random.normal(kx3, (B3, n_input), jnp.float32)
    out3 = jax.block_until_ready(mlp_forward(x3, params))
    ref3 = reference_forward(x3, params)
    assert out3.shape == (B3, n_output)
    assert jnp.allclose(out3, ref3, atol=1e-3, rtol=1e-3), "mismatch vs reference (default tile)"

    print("KERNEL_OK")
</pallas_src>

<mosaic_0001>
module attributes {stable_mosaic.version = 11 : i64} {
  func.func @mlp_kernel(%arg0: i32, %arg1: memref<16x18xf32, #tpu.memory_space<vmem>>, %arg2: memref<18x256xbf16, #tpu.memory_space<vmem>>, %arg3: memref<1x256xf32, #tpu.memory_space<vmem>>, %arg4: memref<256x32xbf16, #tpu.memory_space<vmem>>, %arg5: memref<1x32xf32, #tpu.memory_space<vmem>>, %arg6: memref<32x8xbf16, #tpu.memory_space<vmem>>, %arg7: memref<1x8xf32, #tpu.memory_space<vmem>>, %arg8: memref<8x2xbf16, #tpu.memory_space<vmem>>, %arg9: memref<1x2xf32, #tpu.memory_space<vmem>>, %arg10: memref<16x2xf32, #tpu.memory_space<vmem>>) attributes {dimension_semantics = [#tpu.dimension_semantics<parallel>], iteration_bounds = array<i64: 1>, scalar_prefetch = 0 : i64, scratch_operands = 0 : i64, tpu.core_type = #tpu.core_type<tc>, window_params = [{transform_indices = @transform_0, window_bounds = array<i64: 16, 18>}, {pipeline_mode = #tpu.pipeline_mode<synchronous>, transform_indices = @transform_1, window_bounds = array<i64: 18, 256>}, {pipeline_mode = #tpu.pipeline_mode<synchronous>, transform_indices = @transform_2, window_bounds = array<i64: 1, 256>}, {pipeline_mode = #tpu.pipeline_mode<synchronous>, transform_indices = @transform_3, window_bounds = array<i64: 256, 32>}, {pipeline_mode = #tpu.pipeline_mode<synchronous>, transform_indices = @transform_4, window_bounds = array<i64: 1, 32>}, {pipeline_mode = #tpu.pipeline_mode<synchronous>, transform_indices = @transform_5, window_bounds = array<i64: 32, 8>}, {pipeline_mode = #tpu.pipeline_mode<synchronous>, transform_indices = @transform_6, window_bounds = array<i64: 1, 8>}, {pipeline_mode = #tpu.pipeline_mode<synchronous>, transform_indices = @transform_7, window_bounds = array<i64: 8, 2>}, {pipeline_mode = #tpu.pipeline_mode<synchronous>, transform_indices = @transform_8, window_bounds = array<i64: 1, 2>}, {transform_indices = @transform_9, window_bounds = array<i64: 16, 2>}]} {
    %c0 = arith.constant 0 : index
    %c0_0 = arith.constant 0 : index
    %0 = vector.load %arg1[%c0, %c0_0] : memref<16x18xf32, #tpu.memory_space<vmem>>, vector<16x18xf32>
    %1 = arith.truncf %0 : vector<16x18xf32> to vector<16x18xbf16>
    %c0_1 = arith.constant 0 : index
    %c0_2 = arith.constant 0 : index
    %2 = vector.load %arg2[%c0_1, %c0_2] : memref<18x256xbf16, #tpu.memory_space<vmem>>, vector<18x256xbf16>
    %cst = arith.constant dense<0.000000e+00> : vector<16x256xf32>
    %3 = tpu.matmul %1, %2, %cst {dimension_numbers = #tpu.dot_dimension_numbers<[1], [0], [0], [1], [0, 0, 1, 1], [], []>} : vector<16x18xbf16>, vector<18x256xbf16>, vector<16x256xf32> -> vector<16x256xf32>
    %c0_3 = arith.constant 0 : index
    %c0_4 = arith.constant 0 : index
    %4 = vector.load %arg3[%c0_3, %c0_4] : memref<1x256xf32, #tpu.memory_space<vmem>>, vector<1x256xf32>
    %5 = vector.broadcast %4 : vector<1x256xf32> to vector<16x256xf32>
    %6 = arith.addf %3, %5 : vector<16x256xf32>
    %cst_5 = arith.constant 0.000000e+00 : f32
    %7 = vector.broadcast %cst_5 : f32 to vector<16x256xf32>
    %8 = arith.maximumf %6, %7 : vector<16x256xf32>
    %9 = arith.truncf %8 : vector<16x256xf32> to vector<16x256xbf16>
    %c0_6 = arith.constant 0 : index
    %c0_7 = arith.constant 0 : index
    %10 = vector.load %arg4[%c0_6, %c0_7] : memref<256x32xbf16, #tpu.memory_space<vmem>>, vector<256x32xbf16>
    %cst_8 = arith.constant dense<0.000000e+00> : vector<16x32xf32>
    %11 = tpu.matmul %9, %10, %cst_8 {dimension_numbers = #tpu.dot_dimension_numbers<[1], [0], [0], [1], [0, 0, 1, 1], [], []>} : vector<16x256xbf16>, vector<256x32xbf16>, vector<16x32xf32> -> vector<16x32xf32>
    %c0_9 = arith.constant 0 : index
    %c0_10 = arith.constant 0 : index
    %12 = vector.load %arg5[%c0_9, %c0_10] : memref<1x32xf32, #tpu.memory_space<vmem>>, vector<1x32xf32>
    %13 = vector.broadcast %12 : vector<1x32xf32> to vector<16x32xf32>
    %14 = arith.addf %11, %13 : vector<16x32xf32>
    %cst_11 = arith.constant 0.000000e+00 : f32
    %15 = vector.broadcast %cst_11 : f32 to vector<16x32xf32>
    %16 = arith.maximumf %14, %15 : vector<16x32xf32>
    %17 = arith.truncf %16 : vector<16x32xf32> to vector<16x32xbf16>
    %c0_12 = arith.constant 0 : index
    %c0_13 = arith.constant 0 : index
    %18 = vector.load %arg6[%c0_12, %c0_13] : memref<32x8xbf16, #tpu.memory_space<vmem>>, vector<32x8xbf16>
    %cst_14 = arith.constant dense<0.000000e+00> : vector<16x8xf32>
    %19 = tpu.matmul %17, %18, %cst_14 {dimension_numbers = #tpu.dot_dimension_numbers<[1], [0], [0], [1], [0, 0, 1, 1], [], []>} : vector<16x32xbf16>, vector<32x8xbf16>, vector<16x8xf32> -> vector<16x8xf32>
    %c0_15 = arith.constant 0 : index
    %c0_16 = arith.constant 0 : index
    %20 = vector.load %arg7[%c0_15, %c0_16] : memref<1x8xf32, #tpu.memory_space<vmem>>, vector<1x8xf32>
    %21 = vector.broadcast %20 : vector<1x8xf32> to vector<16x8xf32>
    %22 = arith.addf %19, %21 : vector<16x8xf32>
    %cst_17 = arith.constant 0.000000e+00 : f32
    %23 = vector.broadcast %cst_17 : f32 to vector<16x8xf32>
    %24 = arith.maximumf %22, %23 : vector<16x8xf32>
    %25 = arith.truncf %24 : vector<16x8xf32> to vector<16x8xbf16>
    %c0_18 = arith.constant 0 : index
    %c0_19 = arith.constant 0 : index
    %26 = vector.load %arg8[%c0_18, %c0_19] : memref<8x2xbf16, #tpu.memory_space<vmem>>, vector<8x2xbf16>
    %cst_20 = arith.constant dense<0.000000e+00> : vector<16x2xf32>
    %27 = tpu.matmul %25, %26, %cst_20 {dimension_numbers = #tpu.dot_dimension_numbers<[1], [0], [0], [1], [0, 0, 1, 1], [], []>} : vector<16x8xbf16>, vector<8x2xbf16>, vector<16x2xf32> -> vector<16x2xf32>
    %c0_21 = arith.constant 0 : index
    %c0_22 = arith.constant 0 : index
    %28 = vector.load %arg9[%c0_21, %c0_22] : memref<1x2xf32, #tpu.memory_space<vmem>>, vector<1x2xf32>
    %29 = vector.broadcast %28 : vector<1x2xf32> to vector<16x2xf32>
    %30 = arith.addf %27, %29 : vector<16x2xf32>
    %c0_23 = arith.constant 0 : index
    %c0_24 = arith.constant 0 : index
    %31 = vector.load %arg10[%c0_23, %c0_24] : memref<16x2xf32, #tpu.memory_space<vmem>>, vector<16x2xf32>
    tpu.vector_store %arg10[%c0_23, %c0_24], %30 {strides = array<i32>} : memref<16x2xf32, #tpu.memory_space<vmem>>, vector<16x2xf32>,
    return
  }
  func.func @transform_0(%arg0: i32) -> (i32, i32) {
    %c0_i32 = arith.constant 0 : i32
    %c0_i32_0 = arith.constant 0 : i32
    return %arg0, %c0_i32 : i32, i32
  }
  func.func @transform_1(%arg0: i32) -> (i32, i32) {
    %c0_i32 = arith.constant 0 : i32
    %c0_i32_0 = arith.constant 0 : i32
    %c0_i32_1 = arith.constant 0 : i32
    return %c0_i32, %c0_i32_0 : i32, i32
  }
  func.func @transform_2(%arg0: i32) -> (i32, i32) {
    %c0_i32 = arith.constant 0 : i32
    %c0_i32_0 = arith.constant 0 : i32
    %c0_i32_1 = arith.constant 0 : i32
    return %c0_i32, %c0_i32_0 : i32, i32
  }
  func.func @transform_3(%arg0: i32) -> (i32, i32) {
    %c0_i32 = arith.constant 0 : i32
    %c0_i32_0 = arith.constant 0 : i32
    %c0_i32_1 = arith.constant 0 : i32
    return %c0_i32, %c0_i32_0 : i32, i32
  }
  func.func @transform_4(%arg0: i32) -> (i32, i32) {
    %c0_i32 = arith.constant 0 : i32
    %c0_i32_0 = arith.constant 0 : i32
    %c0_i32_1 = arith.constant 0 : i32
    return %c0_i32, %c0_i32_0 : i32, i32
  }
  func.func @transform_5(%arg0: i32) -> (i32, i32) {
    %c0_i32 = arith.constant 0 : i32
    %c0_i32_0 = arith.constant 0 : i32
    %c0_i32_1 = arith.constant 0 : i32
    return %c0_i32, %c0_i32_0 : i32, i32
  }
  func.func @transform_6(%arg0: i32) -> (i32, i32) {
    %c0_i32 = arith.constant 0 : i32
    %c0_i32_0 = arith.constant 0 : i32
    %c0_i32_1 = arith.constant 0 : i32
    return %c0_i32, %c0_i32_0 : i32, i32
  }
  func.func @transform_7(%arg0: i32) -> (i32, i32) {
    %c0_i32 = arith.constant 0 : i32
    %c0_i32_0 = arith.constant 0 : i32
    %c0_i32_1 = arith.constant 0 : i32
    return %c0_i32, %c0_i32_0 : i32, i32
  }
  func.func @transform_8(%arg0: i32) -> (i32, i32) {
    %c0_i32 = arith.constant 0 : i32
    %c0_i32_0 = arith.constant 0 : i32
    %c0_i32_1 = arith.constant 0 : i32
    return %c0_i32, %c0_i32_0 : i32, i32
  }
  func.func @transform_9(%arg0: i32) -> (i32, i32) {
    %c0_i32 = arith.constant 0 : i32
    %c0_i32_0 = arith.constant 0 : i32
    return %arg0, %c0_i32 : i32, i32
  }
}

</mosaic_0001>

<llo_original>
// kernel: tpu_custom_call.1
$region0: #{tpu_custom_call.1}
  #allocation0 [shape = 'u32[]', space=smem, size = 0x4, offset = 0x4, fixed_abs, tag = 'smem constant byte address 0x4 - core index']
  #allocation1 [shape = 'u32[144,128]{1,0:T(1,128)}', space=vmem, size = 0x12000, scoped, tag = 'internal scratch']
  %s0 = inlined_call_operand.vmem [shape: f32[10,18], index: 0, kind: input, shape index: {}]
  %s1 = inlined_call_operand.vmem [shape: bf16[18,256], index: 1, kind: input, shape index: {}]
  %s2 = inlined_call_operand.vmem [shape: f32[1,256], index: 2, kind: input, shape index: {}]
  %s3 = inlined_call_operand.vmem [shape: bf16[256,32], index: 3, kind: input, shape index: {}]
  %s4 = inlined_call_operand.vmem [shape: f32[1,32], index: 4, kind: input, shape index: {}]
  %s5 = inlined_call_operand.vmem [shape: bf16[32,8], index: 5, kind: input, shape index: {}]
  %s6 = inlined_call_operand.vmem [shape: f32[1,8], index: 6, kind: input, shape index: {}]
  %s7 = inlined_call_operand.vmem [shape: bf16[8,2], index: 7, kind: input, shape index: {}]
  %s8 = inlined_call_operand.vmem [shape: f32[1,2], index: 8, kind: input, shape index: {}]
  %s9 = inlined_call_operand.vmem [shape: f32[10,2], index: 9, kind: output, shape index: {}]
  %s10 = sld [smem:[#allocation0]]
  $region46: #{tpu_custom_call.1} parent=0
    _
  %s12 = ssub.s32 1, %s10
  %s13 = scalar_select 0, %s12, %s10
  // Predicated region
  $region2: #{tpu_custom_call.1} parent=0 // pred_check
    _
  $region3: #{tpu_custom_call.1} parent=0 // pred_check_branch
    %15 = sbr.rel (0) target = $region5
  $region4: #{tpu_custom_call.1} parent=0 // pred_region
    _
  $region5: #{tpu_custom_call.1} parent=0 // pred_fallthru
    _
  // Predicated region
  $region6: #{tpu_custom_call.1} parent=0 // pred_check
    _
  $region7: #{tpu_custom_call.1} parent=0 // pred_check_branch
    %17 = sbr.rel (0) target = $region9
  $region8: #{tpu_custom_call.1} parent=0 // pred_region
    _
  $region9: #{tpu_custom_call.1} parent=0 // pred_fallthru
    _
  // Predicated region
  $region10: #{tpu_custom_call.1} parent=0 // pred_check
    _
  $region11: #{tpu_custom_call.1} parent=0 // pred_check_branch
    %19 = sbr.rel (0) target = $region13
  $region12: #{tpu_custom_call.1} parent=0 // pred_region
    _
  $region13: #{tpu_custom_call.1} parent=0 // pred_fallthru
    _
  // Predicated region
  $region14: #{tpu_custom_call.1} parent=0 // pred_check
    _
  $region15: #{tpu_custom_call.1} parent=0 // pred_check_branch
    %21 = sbr.rel (0) target = $region17
  $region16: #{tpu_custom_call.1} parent=0 // pred_region
    _
  $region17: #{tpu_custom_call.1} parent=0 // pred_fallthru
    _
  // Predicated region
  $region18: #{tpu_custom_call.1} parent=0 // pred_check
    _
  $region19: #{tpu_custom_call.1} parent=0 // pred_check_branch
    %23 = sbr.rel (0) target = $region21
  $region20: #{tpu_custom_call.1} parent=0 // pred_region
    _
  $region21: #{tpu_custom_call.1} parent=0 // pred_fallthru
    _
  // Predicated region
  $region22: #{tpu_custom_call.1} parent=0 // pred_check
    _
  $region23: #{tpu_custom_call.1} parent=0 // pred_check_branch
    %25 = sbr.rel (0) target = $region25
  $region24: #{tpu_custom_call.1} parent=0 // pred_region
    _
  $region25: #{tpu_custom_call.1} parent=0 // pred_fallthru
    _
  // Predicated region
  $region26: #{tpu_custom_call.1} parent=0 // pred_check
    _
  $region27: #{tpu_custom_call.1} parent=0 // pred_check_branch
    %27 = sbr.rel (0) target = $region29
  $region28: #{tpu_custom_call.1} parent=0 // pred_region
    _
  $region29: #{tpu_custom_call.1} parent=0 // pred_fallthru
    _
  // Predicated region
  $region30: #{tpu_custom_call.1} parent=0 // pred_check
    _
  $region31: #{tpu_custom_call.1} parent=0 // pred_check_branch
    %29 = sbr.rel (0) target = $region33
  $region32: #{tpu_custom_call.1} parent=0 // pred_region
    _
  $region33: #{tpu_custom_call.1} parent=0 // pred_fallthru
    _
  // Predicated region
  $region34: #{tpu_custom_call.1} parent=0 // pred_check
    _
  $region35: #{tpu_custom_call.1} parent=0 // pred_check_branch
    %31 = sbr.rel (0) target = $region37
  $region36: #{tpu_custom_call.1} parent=0 // pred_region
    _
  $region37: #{tpu_custom_call.1} parent=0 // pred_fallthru
    _
  %v33 = vld [vmem:[%s0] sm:$0xff]
  %v34 = vld [vmem:[%s0 + $0x8] sm:$0xff]
  %v35 = vpack.c.bf16 %v34, %v33
  %v36 = vld [vmem:[%s1] sm:$0xff]
  %v37 = vld [vmem:[%s1 + $0x8] sm:$0xff]
  %v38 = vld [vmem:[%s1 + $0x10] sm:$0x11]
  %v39 = vld [vmem:[%s2] sm:$0x3]
  %v41 = vlaneseq
  %v42 = vshrl.u32 %v41, 7
  %v43 = vsub.s32 0, %v42
  %v44 = vrot.slane %v39, %v43
  %v45 = vlaneseq
  %v46 = vshrl.u32 %v45, 7
  %v47 = vsub.s32 1, %v46
  %v48 = vrot.slane %v39, %v47
  %v54 = vunpack.c.l.b16 %v36
  %v55 = vunpack.c.h.b16 %v36
  %v56 = vunpack.c.l.b16 %v37
  %v57 = vunpack.c.h.b16 %v37
  %v58 = vunpack.c.l.b16 %v38
  %v59 = vunpack.c.h.b16 %v38
  %v60 = vpack.c.b16 %v56, %v54
  %v61 = vpack.c.b16 %v57, %v55
  %v62 = vpack.c.b16 %v58, %v58
  %v63 = vpack.c.b16 %v59, %v59
  %vm66 = vcmask 146432
  %v68 = vsel %vm66, %v35, 0
  %vm70 = vcmask 1040384
  %v72 = vsel %vm70, %v62, 0
  %v75 = vsel %vm70, %v63, 0
  %77 = vmatprep.subr.bf16.mxu0 %v61
  %78 = vmatpush1.bf16.msra.mxu0 %v60
  %79 = vmatprep.subr.bf16.mxu0 %v75
  %80 = vmatpush1.bf16.msra.mxu0 %v72
  %81 = vmatprep.subr.bf16.mxu0 0
  %82 = vmatpush1.bf16.msra.mxu0 0
  %83 = vmatprep.subr.bf16.mxu0 0
  %84 = vmatpush1.bf16.msra.mxu0 0
  %85 = vmatprep.subr.bf16.mxu0 0
  %86 = vmatpush1.bf16.msra.mxu0 0
  %87 = vmatprep.subr.bf16.mxu0 0
  %88 = vmatpush1.bf16.msra.mxu0 0
  %89 = vmatprep.subr.bf16.mxu0 0
  %90 = vmatpush1.bf16.msra.mxu0 0
  %91 = vmatprep.subr.bf16.mxu0 0
  %92 = vmatpush1.bf16.msra.mxu0 0
  %93 = vmatprep.subr.bf16.mxu0 0
  %94 = vmatpush1.bf16.msra.mxu0 0
  %95 = vmatprep.subr.bf16.mxu0 0
  %96 = vmatpush1.bf16.msra.mxu0 0
  %97 = vmatprep.subr.bf16.mxu0 0
  %98 = vmatpush1.bf16.msra.mxu0 0
  %99 = vmatprep.subr.bf16.mxu0 0
  %100 = vmatpush1.bf16.msra.mxu0 0
  %101 = vmatprep.subr.bf16.mxu0 0
  %102 = vmatpush1.bf16.msra.mxu0 0
  %103 = vmatprep.subr.bf16.mxu0 0
  %104 = vmatpush1.bf16.msra.mxu0 0
  %105 = vmatprep.subr.bf16.mxu0 0
  %106 = vmatpush1.bf16.msra.mxu0 0
  %107 = vmatprep.subr.bf16.mxu0 0
  %108 = vmatpush1.bf16.msra.mxu0 0
  %109 = vmatprep.mubr.bf16.mxu0 0
  %110 = vmatmul.mubr.bf16.gmra.mrb[0].mxu0 %v68
  %v111 = vpop.f32.mrb[0].mxu0
  %v112 = vadd.f32 %v44, %v111
  %v113 = vpop.f32.mrb[0].mxu0
  %v114 = vadd.f32 %v48, %v113
  %v115 = vpop.f32.mrb[0].mxu0
  %v116 = vadd.f32 %v44, %v115
  %v117 = vpop.f32.mrb[0].mxu0
  %v118 = vadd.f32 %v48, %v117
  %119 = vdwg.mxu0
  %v120 = vmax.f32 %v112, 0.0
  %v121 = vmax.f32 %v114, 0.0
  %v122 = vmax.f32 %v116, 0.0
  %v123 = vmax.f32 %v118, 0.0
  %v124 = vpack.c.bf16 %v122, %v120
  %v125 = vpack.c.bf16 %v123, %v121
  %v126 = vld [vmem:[%s3] sm:$0xf]
  %v127 = vld [vmem:[%s3 + $0x4] sm:$0xf]
  %v128 = vld [vmem:[%s3 + $0x8] sm:$0xf]
  %v129 = vld [vmem:[%s3 + $0xc] sm:$0xf]
  %v130 = vld [vmem:[%s3 + $0x10] sm:$0xf]
  %v131 = vld [vmem:[%s3 + $0x14] sm:$0xf]
  %v132 = vld [vmem:[%s3 + $0x18] sm:$0xf]
  %v133 = vld [vmem:[%s3 + $0x1c] sm:$0xf]
  %v134 = vld [vmem:[%s3 + $0x20] sm:$0xf]
  %v135 = vld [vmem:[%s3 + $0x24] sm:$0xf]
  %v136 = vld [vmem:[%s3 + $0x28] sm:$0xf]
  %v137 = vld [vmem:[%s3 + $0x2c] sm:$0xf]
  %v138 = vld [vmem:[%s3 + $0x30] sm:$0xf]
  %v139 = vld [vmem:[%s3 + $0x34] sm:$0xf]
  %v140 = vld [vmem:[%s3 + $0x38] sm:$0xf]
  %v141 = vld [vmem:[%s3 + $0x3c] sm:$0xf]
  %v142 = vld [vmem:[%s3 + $0x40] sm:$0xf]
  %v143 = vld [vmem:[%s3 + $0x44] sm:$0xf]
  %v144 = vld [vmem:[%s3 + $0x48] sm:$0xf]
  %v145 = vld [vmem:[%s3 + $0x4c] sm:$0xf]
  %v146 = vld [vmem:[%s3 + $0x50] sm:$0xf]
  %v147 = vld [vmem:[%s3 + $0x54] sm:$0xf]
  %v148 = vld [vmem:[%s3 + $0x58] sm:$0xf]
  %v149 = vld [vmem:[%s3 + $0x5c] sm:$0xf]
  %v150 = vld [vmem:[%s3 + $0x60] sm:$0xf]
  %v151 = vld [vmem:[%s3 + $0x64] sm:$0xf]
  %v152 = vld [vmem:[%s3 + $0x68] sm:$0xf]
  %v153 = vld [vmem:[%s3 + $0x6c] sm:$0xf]
  %v154 = vld [vmem:[%s3 + $0x70] sm:$0xf]
  %v155 = vld [vmem:[%s3 + $0x74] sm:$0xf]
  %v156 = vld [vmem:[%s3 + $0x78] sm:$0xf]
  %v157 = vld [vmem:[%s3 + $0x7c] sm:$0xf]
  %v158 = vld [vmem:[%s4] sm:$0x1]
  %v160 = vlaneseq
  %v161 = vshrl.u32 %v160, 7
  %v162 = vsub.s32 0, %v161
  %v163 = vrot.slane %v158, %v162
  %v197 = vunpack.c.l.b16 %v126
  %v198 = vunpack.c.l.b16 %v127
  %v199 = vunpack.c.l.b16 %v128
  %v200 = vunpack.c.l.b16 %v129
  %v201 = vunpack.c.l.b16 %v130
  %v202 = vunpack.c.l.b16 %v131
  %v203 = vunpack.c.l.b16 %v132
  %v204 = vunpack.c.l.b16 %v133
  %v205 = vunpack.c.l.b16 %v134
  %v206 = vunpack.c.l.b16 %v135
  %v207 = vunpack.c.l.b16 %v136
  %v208 = vunpack.c.l.b16 %v137
  %v209 = vunpack.c.l.b16 %v138
  %v210 = vunpack.c.l.b16 %v139
  %v211 = vunpack.c.l.b16 %v140
  %v212 = vunpack.c.l.b16 %v141
  %v213 = vunpack.c.l.b16 %v142
  %v214 = vunpack.c.l.b16 %v143
  %v215 = vunpack.c.l.b16 %v144
  %v216 = vunpack.c.l.b16 %v145
  %v217 = vunpack.c.l.b16 %v146
  %v218 = vunpack.c.l.b16 %v147
  %v219 = vunpack.c.l.b16 %v148
  %v220 = vunpack.c.l.b16 %v149
  %v221 = vunpack.c.l.b16 %v150
  %v222 = vunpack.c.l.b16 %v151
  %v223 = vunpack.c.l.b16 %v152
  %v224 = vunpack.c.l.b16 %v153
  %v225 = vunpack.c.l.b16 %v154
  %v226 = vunpack.c.l.b16 %v155
  %v227 = vunpack.c.l.b16 %v156
  %v228 = vunpack.c.l.b16 %v157
  %v229 = vpack.c.b16 %v198, %v197
  %v230 = vpack.c.b16 %v200, %v199
  %v231 = vpack.c.b16 %v202, %v201
  %v232 = vpack.c.b16 %v204, %v203
  %v233 = vpack.c.b16 %v206, %v205
  %v234 = vpack.c.b16 %v208, %v207
  %v235 = vpack.c.b16 %v210, %v209
  %v236 = vpack.c.b16 %v212, %v211
  %v237 = vpack.c.b16 %v214, %v213
  %v238 = vpack.c.b16 %v216, %v215
  %v239 = vpack.c.b16 %v218, %v217
  %v240 = vpack.c.b16 %v220, %v219
  %v241 = vpack.c.b16 %v222, %v221
  %v242 = vpack.c.b16 %v224, %v223
  %v243 = vpack.c.b16 %v226, %v225
  %v244 = vpack.c.b16 %v228, %v227
  %261 = vmatprep.subr.bf16.mxu0 0
  %262 = vmatpush1.bf16.msra.mxu0 %v229
  %263 = vmatprep.subr.bf16.mxu0 0
  %264 = vmatpush1.bf16.msra.mxu0 %v230
  %265 = vmatprep.subr.bf16.mxu0 0
  %266 = vmatpush1.bf16.msra.mxu0 %v231
  %267 = vmatprep.subr.bf16.mxu0 0
  %268 = vmatpush1.bf16.msra.mxu0 %v232
  %269 = vmatprep.subr.bf16.mxu0 0
  %270 = vmatpush1.bf16.msra.mxu0 %v233
  %271 = vmatprep.subr.bf16.mxu0 0
  %272 = vmatpush1.bf16.msra.mxu0 %v234
  %273 = vmatprep.subr.bf16.mxu0 0
  %274 = vmatpush1.bf16.msra.mxu0 %v235
  %275 = vmatprep.subr.bf16.mxu0 0
  %276 = vmatpush1.bf16.msra.mxu0 %v236
  %277 = vmatprep.subr.bf16.mxu0 0
  %278 = vmatpush1.bf16.msra.mxu0 %v237
  %279 = vmatprep.subr.bf16.mxu0 0
  %280 = vmatpush1.bf16.msra.mxu0 %v238
  %281 = vmatprep.subr.bf16.mxu0 0
  %282 = vmatpush1.bf16.msra.mxu0 %v239
  %283 = vmatprep.subr.bf16.mxu0 0
  %284 = vmatpush1.bf16.msra.mxu0 %v240
  %285 = vmatprep.subr.bf16.mxu0 0
  %286 = vmatpush1.bf16.msra.mxu0 %v241
  %287 = vmatprep.subr.bf16.mxu0 0
  %288 = vmatpush1.bf16.msra.mxu0 %v242
  %289 = vmatprep.subr.bf16.mxu0 0
  %290 = vmatpush1.bf16.msra.mxu0 %v243
  %291 = vmatprep.subr.bf16.mxu0 0
  %292 = vmatpush1.bf16.msra.mxu0 %v244
  %293 = vmatprep.mubr.bf16.mxu0 %v125
  %294 = vmatmul.mubr.bf16.gmra.mrb[0].mxu0 %v124
  %v295 = vpop.f32.mrb[0].mxu0
  %v296 = vadd.f32 %v163, %v295
  %v297 = vpop.f32.mrb[0].mxu0
  %v298 = vpop.f32.mrb[0].mxu0
  %v299 = vadd.f32 %v163, %v298
  %v300 = vpop.f32.mrb[0].mxu0
  %301 = vdwg.mxu0
  %v302 = vmax.f32 %v296, 0.0
  %v303 = vmax.f32 %v299, 0.0
  %v304 = vpack.c.bf16 %v303, %v302
  %v305 = vld [vmem:[%s5] sm:$0xf]
  %v306 = vld [vmem:[%s5 + $0x4] sm:$0xf]
  %v307 = vld [vmem:[%s5 + $0x8] sm:$0xf]
  %v308 = vld [vmem:[%s5 + $0xc] sm:$0xf]
  %v309 = vld [vmem:[%s6] sm:$0x1]
  %v311 = vlaneseq
  %v312 = vshrl.u32 %v311, 7
  %v313 = vsub.s32 0, %v312
  %v314 = vrot.slane %v309, %v313
  %v320 = vunpack.c.l.b16 %v305
  %v321 = vunpack.c.l.b16 %v306
  %v322 = vunpack.c.l.b16 %v307
  %v323 = vunpack.c.l.b16 %v308
  %v324 = vpack.c.b16 %v321, %v320
  %v325 = vpack.c.b16 %v323, %v322
  %vm328 = vcmask 261120
  %v330 = vsel %vm328, %v304, 0
  %332 = vmatprep.subr.bf16.mxu0 0
  %333 = vmatpush1.bf16.msra.mxu0 %v324
  %334 = vmatprep.subr.bf16.mxu0 0
  %335 = vmatpush1.bf16.msra.mxu0 %v325
  %336 = vmatprep.subr.bf16.mxu0 0
  %337 = vmatpush1.bf16.msra.mxu0 0
  %338 = vmatprep.subr.bf16.mxu0 0
  %339 = vmatpush1.bf16.msra.mxu0 0
  %340 = vmatprep.subr.bf16.mxu0 0
  %341 = vmatpush1.bf16.msra.mxu0 0
  %342 = vmatprep.subr.bf16.mxu0 0
  %343 = vmatpush1.bf16.msra.mxu0 0
  %344 = vmatprep.subr.bf16.mxu0 0
  %345 = vmatpush1.bf16.msra.mxu0 0
  %346 = vmatprep.subr.bf16.mxu0 0
  %347 = vmatpush1.bf16.msra.mxu0 0
  %348 = vmatprep.subr.bf16.mxu0 0
  %349 = vmatpush1.bf16.msra.mxu0 0
  %350 = vmatprep.subr.bf16.mxu0 0
  %351 = vmatpush1.bf16.msra.mxu0 0
  %352 = vmatprep.subr.bf16.mxu0 0
  %353 = vmatpush1.bf16.msra.mxu0 0
  %354 = vmatprep.subr.bf16.mxu0 0
  %355 = vmatpush1.bf16.msra.mxu0 0
  %356 = vmatprep.subr.bf16.mxu0 0
  %357 = vmatpush1.bf16.msra.mxu0 0
  %358 = vmatprep.subr.bf16.mxu0 0
  %359 = vmatpush1.bf16.msra.mxu0 0
  %360 = vmatprep.subr.bf16.mxu0 0
  %361 = vmatpush1.bf16.msra.mxu0 0
  %362 = vmatprep.subr.bf16.mxu0 0
  %363 = vmatpush1.bf16.msra.mxu0 0
  %364 = vmatprep.mubr.bf16.mxu0 0
  %365 = vmatmul.mubr.bf16.gmra.mrb[0].mxu0 %v330
  %v366 = vpop.f32.mrb[0].mxu0
  %v367 = vadd.f32 %v314, %v366
  %v368 = vpop.f32.mrb[0].mxu0
  %v369 = vpop.f32.mrb[0].mxu0
  %v370 = vadd.f32 %v314, %v369
  %v371 = vpop.f32.mrb[0].mxu0
  %372 = vdwg.mxu0
  %v373 = vmax.f32 %v367, 0.0
  %v374 = vmax.f32 %v370, 0.0
  %v375 = vpack.c.bf16 %v374, %v373
  %v376 = vld [vmem:[%s7] sm:$0xf]
  %v377 = vld [vmem:[%s8] sm:$0x1]
  %v379 = vlaneseq
  %v380 = vshrl.u32 %v379, 7
  %v381 = vsub.s32 0, %v380
  %v382 = vrot.slane %v377, %v381
  %vm384 = vcmask 64512
  %v386 = vsel %vm384, %v375, 0
  %vm388 = vcmask 1043456
  %v390 = vsel %vm388, %v376, 0
  %392 = vmatprep.subr.bf16.mxu0 0
  %393 = vmatpush1.bf16.msra.mxu0 %v390
  %394 = vmatprep.subr.bf16.mxu0 0
  %395 = vmatpush1.bf16.msra.mxu0 0
  %396 = vmatprep.subr.bf16.mxu0 0
  %397 = vmatpush1.bf16.msra.mxu0 0
  %398 = vmatprep.subr.bf16.mxu0 0
  %399 = vmatpush1.bf16.msra.mxu0 0
  %400 = vmatprep.subr.bf16.mxu0 0
  %401 = vmatpush1.bf16.msra.mxu0 0
  %402 = vmatprep.subr.bf16.mxu0 0
  %403 = vmatpush1.bf16.msra.mxu0 0
  %404 = vmatprep.subr.bf16.mxu0 0
  %405 = vmatpush1.bf16.msra.mxu0 0
  %406 = vmatprep.subr.bf16.mxu0 0
  %407 = vmatpush1.bf16.msra.mxu0 0
  %408 = vmatprep.subr.bf16.mxu0 0
  %409 = vmatpush1.bf16.msra.mxu0 0
  %410 = vmatprep.subr.bf16.mxu0 0
  %411 = vmatpush1.bf16.msra.mxu0 0
  %412 = vmatprep.subr.bf16.mxu0 0
  %413 = vmatpush1.bf16.msra.mxu0 0
  %414 = vmatprep.subr.bf16.mxu0 0
  %415 = vmatpush1.bf16.msra.mxu0 0
  %416 = vmatprep.subr.bf16.mxu0 0
  %417 = vmatpush1.bf16.msra.mxu0 0
  %418 = vmatprep.subr.bf16.mxu0 0
  %419 = vmatpush1.bf16.msra.mxu0 0
  %420 = vmatprep.subr.bf16.mxu0 0
  %421 = vmatpush1.bf16.msra.mxu0 0
  %422 = vmatprep.subr.bf16.mxu0 0
  %423 = vmatpush1.bf16.msra.mxu0 0
  %424 = vmatprep.mubr.bf16.mxu0 0
  %425 = vmatmul.mubr.bf16.gmra.mrb[0].mxu0 %v386
  %v426 = vpop.f32.mrb[0].mxu0
  %v427 = vadd.f32 %v382, %v426
  %v428 = vpop.f32.mrb[0].mxu0
  %v429 = vpop.f32.mrb[0].mxu0
  %v430 = vadd.f32 %v382, %v429
  %v431 = vpop.f32.mrb[0].mxu0
  %432 = vdwg.mxu0
  %vm433 = vcmask 15360
  %434 = vst.msk [vmem:[%s9] sm:$0xff] %vm433, %v427
  %435 = vst.msk [vmem:[%s9 + $0x8] sm:$0xff] %vm433, %v430
  // Predicated region
  $region38: #{tpu_custom_call.1} parent=0 // pred_check
    _
  $region39: #{tpu_custom_call.1} parent=0 // pred_check_branch
    %437 = sbr.rel (0) target = $region41
  $region40: #{tpu_custom_call.1} parent=0 // pred_region
    _
  $region41: #{tpu_custom_call.1} parent=0 // pred_fallthru
    _
  // Predicated region
  $region42: #{tpu_custom_call.1} parent=0 // pred_check
    _
  $region43: #{tpu_custom_call.1} parent=0 // pred_check_branch
    %439 = sbr.rel (0) target = $region45
  $region44: #{tpu_custom_call.1} parent=0 // pred_region
    _
  $region45: #{tpu_custom_call.1} parent=0 // pred_fallthru
    _

</llo_original>
